<compile_context>
chip_gen: v5e
topology: v5e:2x2
jax: 0.10.0
libtpu: 0.0.40
codegen_flags: <defaults>
</compile_context>

<pallas_src>
import functools

import jax
import jax.numpy as jnp
from jax.experimental import pallas as pl
from jax.experimental.pallas import tpu as pltpu

_LANE = 128
_SUBLANE_F32 = 8
_SUBLANE_BF16 = 16


def _round_up(n, m):
    return (n + m - 1) // m * m


def _pad_dim(d):
    # Lane-pad only dims that already span at least one lane; small dims stream
    # unpadded (full-extent blocks are legal) to avoid 4x HBM inflation.
    return d if d < _LANE else _round_up(d, _LANE)


# ---------------------------------------------------------------------------
# Kernel
# ---------------------------------------------------------------------------
def _residual_block_kernel(x_ref, wh_ref, bh_ref, wo_ref, wr_ref, bcat_ref, o_ref):
    """One row-tile of the fused residual block.

    x_ref   : (tm, d_in_p)                     compute dtype (f32 or bf16)
    wh_ref  : (d_in_p, d_hid_p)                compute dtype
    bh_ref  : (1, d_hid_p)                     f32
    wo_ref  : (d_hid_p, d_out_p)               compute dtype
    wr_ref  : (d_in_p, d_out_p)                compute dtype
    bcat_ref: (1, d_out_p)  == bo + br         f32
    o_ref   : (tm, d_out_p)
    """
    x = x_ref[...]

    # hidden = SiLU(x @ Wh + bh) -- MXU dot with f32 accumulation, SiLU in f32.
    h = jnp.dot(x, wh_ref[...], preferred_element_type=jnp.float32) + bh_ref[...]
    h = h * jax.nn.sigmoid(h)

    # out = h @ Wo + x @ Wr + (bo + br)   (two accumulating dots, no concat)
    out = jnp.dot(h.astype(wo_ref.dtype), wo_ref[...],
                  preferred_element_type=jnp.float32)
    out = out + jnp.dot(x, wr_ref[...], preferred_element_type=jnp.float32)
    out = out + bcat_ref[...]

    o_ref[...] = out.astype(o_ref.dtype)


# ---------------------------------------------------------------------------
# One-time capability probe (cached; NOT on the per-call hot path)
# ---------------------------------------------------------------------------
def _copy_kernel(x_ref, o_ref):
    o_ref[...] = x_ref[...]


@functools.lru_cache(maxsize=None)
def _single_buffer_supported():
    """Does this jax accept pipeline_mode=pl.Buffered(1) on a BlockSpec?"""
    try:
        fn = pl.pallas_call(
            _copy_kernel,
            out_shape=jax.ShapeDtypeStruct((8, 128), jnp.float32),
            grid=(1,),
            in_specs=[pl.BlockSpec((8, 128), lambda i: (0, 0),
                                   pipeline_mode=pl.Buffered(1))],
            out_specs=pl.BlockSpec((8, 128), lambda i: (0, 0)),
        )
        jax.block_until_ready(fn(jnp.zeros((8, 128), jnp.float32)))
        return True
    except Exception:  # version-dependent capability probe only
        return False


# ---------------------------------------------------------------------------
# One-time parameter preparation (hoisted out of the forward pass)
# ---------------------------------------------------------------------------
def prepare_residual_block_params(wh, bh, wo, bo, wr, br, *, compute_dtype=None):
    """Pad / cast / fuse ResidualBlock weights once.

    Weights are [in_features, out_features] (transposed vs. torch nn.Linear).
    compute_dtype=jnp.bfloat16 is recommended on v6e/v7x (f32 accumulation and
    f32 biases are retained inside the kernel).
    """
    d_in, d_hid = wh.shape
    d_out = wo.shape[1]
    assert wo.shape[0] == d_hid and wr.shape == (d_in, d_out)
    assert bh.shape == (d_hid,) and bo.shape == (d_out,) and br.shape == (d_out,)

    d_in_p, d_hid_p, d_out_p = _pad_dim(d_in), _pad_dim(d_hid), _pad_dim(d_out)
    cdt = jnp.dtype(compute_dtype) if compute_dtype is not None else jnp.dtype(wh.dtype)

    wh_p = jnp.pad(wh, ((0, d_in_p - d_in), (0, d_hid_p - d_hid))).astype(cdt)
    wo_p = jnp.pad(wo, ((0, d_hid_p - d_hid), (0, d_out_p - d_out))).astype(cdt)
    wr_p = jnp.pad(wr, ((0, d_in_p - d_in), (0, d_out_p - d_out))).astype(cdt)
    bh_p = jnp.pad(bh, (0, d_hid_p - d_hid)).reshape(1, d_hid_p).astype(jnp.float32)
    bcat = jnp.pad(bo + br, (0, d_out_p - d_out)).reshape(1, d_out_p).astype(jnp.float32)

    return dict(wh=wh_p, bh=bh_p, wo=wo_p, wr=wr_p, bcat=bcat,
                d_in=d_in, d_hid=d_hid, d_out=d_out, compute_dtype=cdt)


# ---------------------------------------------------------------------------
# Forward pass
# ---------------------------------------------------------------------------
def residual_block_apply(params, x, *, tm=512, out_dtype=None,
                         vmem_limit_bytes=None):
    """x: [..., d_in] -> [..., d_out] with pre-prepared (padded) params.

    tm: row tile. 512 fits v7x's 64 MiB VMEM at TimesFM dims; raise to
    1024-2048 on v5e/v6e (128 MiB VMEM).
    """
    cdt = params["compute_dtype"]
    d_in, d_out = params["d_in"], params["d_out"]
    wh_p, bh_p, wo_p, wr_p, bcat = (params["wh"], params["bh"], params["wo"],
                                    params["wr"], params["bcat"])
    d_in_p, d_hid_p = wh_p.shape
    d_out_p = wo_p.shape[1]

    orig_shape = x.shape
    assert orig_shape[-1] == d_in
    odt = jnp.dtype(out_dtype) if out_dtype is not None else jnp.dtype(x.dtype)

    x2 = x.reshape(-1, d_in).astype(cdt)
    m = x2.shape[0]

    # Sublane-aligned adaptive row tile (bf16 packs 2 rows/sublane -> floor 16).
    sub = _SUBLANE_BF16 if cdt == jnp.bfloat16 else _SUBLANE_F32
    tm_eff = max(sub, min(_round_up(tm, sub), _round_up(m, sub)))
    # Keep >=2 grid steps when possible so ("parallel",) shards over v7x's 2 TCs.
    if m > sub:
        tm_eff = min(tm_eff, max(sub, _round_up(pl.cdiv(m, 2), sub)))
    m_pad = _round_up(m, tm_eff)

    # Per-call padding of x only where actually needed (small dims unpadded).
    if m_pad != m or d_in_p != d_in:
        x2 = jnp.pad(x2, ((0, m_pad - m), (0, d_in_p - d_in)))

    grid = (m_pad // tm_eff,)
    single_buf = _single_buffer_supported()
    wkw = dict(pipeline_mode=pl.Buffered(1)) if single_buf else {}

    # VMEM footprint estimate (+25% margin) instead of a blanket 64 MiB request.
    w_item = jnp.dtype(cdt).itemsize
    wbuf = 1 if single_buf else 2
    vmem_est = (
        wbuf * (wh_p.size + wo_p.size + wr_p.size) * w_item
        + wbuf * (bh_p.size + bcat.size) * 4
        + 2 * tm_eff * d_in_p * w_item                       # x tiles (double-buffered)
        + 2 * tm_eff * d_out_p * jnp.dtype(odt).itemsize     # out tiles
        + 4 * tm_eff * (d_hid_p + d_out_p) * 4               # f32 intermediates + slack
    )
    if vmem_limit_bytes is None:
        vmem_limit_bytes = int(min(max(vmem_est * 1.25, 16 * 2**20), 100 * 2**20))

    cost = pl.CostEstimate(
        flops=2 * m_pad * (d_in_p * d_hid_p + d_hid_p * d_out_p + d_in_p * d_out_p),
        transcendentals=m_pad * d_hid_p,
        bytes_accessed=int(
            m_pad * d_in_p * w_item
            + (wh_p.size + wo_p.size + wr_p.size) * w_item
            + (bh_p.size + bcat.size) * 4
            + m_pad * d_out_p * jnp.dtype(odt).itemsize),
    )

    out = pl.pallas_call(
        _residual_block_kernel,
        out_shape=jax.ShapeDtypeStruct((m_pad, d_out_p), odt),
        grid_spec=pltpu.PrefetchScalarGridSpec(
            num_scalar_prefetch=0,
            grid=grid,
            in_specs=[
                pl.BlockSpec((tm_eff, d_in_p), lambda i: (i, 0)),            # x tile
                pl.BlockSpec((d_in_p, d_hid_p), lambda i: (0, 0), **wkw),    # Wh
                pl.BlockSpec((1, d_hid_p), lambda i: (0, 0), **wkw),         # bh
                pl.BlockSpec((d_hid_p, d_out_p), lambda i: (0, 0), **wkw),   # Wo
                pl.BlockSpec((d_in_p, d_out_p), lambda i: (0, 0), **wkw),    # Wr
                pl.BlockSpec((1, d_out_p), lambda i: (0, 0), **wkw),         # bo+br
            ],
            out_specs=pl.BlockSpec((tm_eff, d_out_p), lambda i: (i, 0)),
        ),
        compiler_params=pltpu.CompilerParams(
            dimension_semantics=("parallel",),
            vmem_limit_bytes=vmem_limit_bytes),
        cost_estimate=cost,
    )(x2, wh_p, bh_p, wo_p, wr_p, bcat)

    if m_pad != m or d_out_p != d_out:
        out = out[:m, :d_out]
    return out.reshape(*orig_shape[:-1], d_out)


def residual_block(x, wh, bh, wo, bo, wr, br, **kwargs):
    """Convenience one-shot wrapper (prefer prepare + apply in hot loops)."""
    compute_dtype = kwargs.pop("compute_dtype", None)
    params = prepare_residual_block_params(wh, bh, wo, bo, wr, br,
                                           compute_dtype=compute_dtype)
    return residual_block_apply(params, x, **kwargs)


# ---------------------------------------------------------------------------
# Reference + demo
# ---------------------------------------------------------------------------
def _init_linear(key, fan_in, fan_out, dtype=jnp.float32):
    """Deterministic init mimicking nn.Linear's uniform(-1/sqrt(fan_in), +)."""
    kw, kb = jax.random.split(key)
    bound = 1.0 / jnp.sqrt(fan_in)
    # stored as [in, out] (transposed vs. PyTorch's [out, in])
    w = jax.random.uniform(kw, (fan_in, fan_out), dtype, -bound, bound)
    b = jax.random.uniform(kb, (fan_out,), dtype, -bound, bound)
    return w, b


def _reference(x, wh, bh, wo, bo, wr, br):
    h = x @ wh + bh
    h = h * jax.nn.sigmoid(h)
    return h @ wo + bo + (x @ wr + br)


if __name__ == "__main__":
    # Small shapes implied by the module: x is [batch, seq, input_dims].
    batch, seq = 2, 8
    input_dims, hidden_dims, output_dims = 32, 64, 32

    key = jax.random.PRNGKey(0)
    kx, kh, ko, kr = jax.random.split(key, 4)

    x = jax.random.normal(kx, (batch, seq, input_dims), jnp.float32)
    wh, bh = _init_linear(kh, input_dims, hidden_dims)
    wo, bo = _init_linear(ko, hidden_dims, output_dims)
    wr, br = _init_linear(kr, input_dims, output_dims)

    ref = _reference(x, wh, bh, wo, bo, wr, br)

    # f32 path: exact parity with the PyTorch reference.
    params_f32 = prepare_residual_block_params(wh, bh, wo, bo, wr, br)
    out = jax.block_until_ready(residual_block_apply(params_f32, x))
    assert out.shape == (batch, seq, output_dims)
    assert jnp.allclose(out, ref, atol=1e-5, rtol=1e-5), "f32 mismatch vs reference"

    # bf16-input / f32-accumulation path (recommended config on v6e/v7x).
    params_bf16 = prepare_residual_block_params(wh, bh, wo, bo, wr, br,
                                                compute_dtype=jnp.bfloat16)
    out_bf16 = jax.block_until_ready(
        residual_block_apply(params_bf16, x, out_dtype=jnp.float32))
    assert jnp.allclose(out_bf16, ref, atol=5e-2, rtol=5e-2), "bf16 mismatch vs reference"

    print("KERNEL_OK")
</pallas_src>

<mosaic_0001>
module attributes {stable_mosaic.version = 11 : i64} {
  func.func @_copy_kernel(%arg0: i32, %arg1: memref<8x128xf32, #tpu.memory_space<vmem>>, %arg2: memref<8x128xf32, #tpu.memory_space<vmem>>) attributes {dimension_semantics = [#tpu.dimension_semantics<arbitrary>], iteration_bounds = array<i64: 1>, scalar_prefetch = 0 : i64, scratch_operands = 0 : i64, tpu.core_type = #tpu.core_type<tc>, window_params = [{pipeline_mode = #tpu.pipeline_mode<synchronous>, transform_indices = @transform_0, window_bounds = array<i64: 8, 128>}, {pipeline_mode = #tpu.pipeline_mode<synchronous>, transform_indices = @transform_1, window_bounds = array<i64: 8, 128>}]} {
    %c0 = arith.constant 0 : index
    %c0_0 = arith.constant 0 : index
    %0 = vector.load %arg1[%c0, %c0_0] : memref<8x128xf32, #tpu.memory_space<vmem>>, vector<8x128xf32>
    %c0_1 = arith.constant 0 : index
    %c0_2 = arith.constant 0 : index
    %1 = vector.load %arg2[%c0_1, %c0_2] : memref<8x128xf32, #tpu.memory_space<vmem>>, vector<8x128xf32>
    tpu.vector_store %arg2[%c0_1, %c0_2], %0 {strides = array<i32>} : memref<8x128xf32, #tpu.memory_space<vmem>>, vector<8x128xf32>,
    return
  }
  func.func @transform_0(%arg0: i32) -> (i32, i32) {
    %c0_i32 = arith.constant 0 : i32
    %c0_i32_0 = arith.constant 0 : i32
    %c0_i32_1 = arith.constant 0 : i32
    return %c0_i32, %c0_i32_0 : i32, i32
  }
  func.func @transform_1(%arg0: i32) -> (i32, i32) {
    %c0_i32 = arith.constant 0 : i32
    %c0_i32_0 = arith.constant 0 : i32
    %c0_i32_1 = arith.constant 0 : i32
    return %c0_i32, %c0_i32_0 : i32, i32
  }
}

module attributes {stable_mosaic.version = 11 : i64} {
  func.func @_residual_block_kernel(%arg0: i32, %arg1: memref<8x32xf32, #tpu.memory_space<vmem>>, %arg2: memref<32x64xf32, #tpu.memory_space<vmem>>, %arg3: memref<1x64xf32, #tpu.memory_space<vmem>>, %arg4: memref<64x32xf32, #tpu.memory_space<vmem>>, %arg5: memref<32x32xf32, #tpu.memory_space<vmem>>, %arg6: memref<1x32xf32, #tpu.memory_space<vmem>>, %arg7: memref<8x32xf32, #tpu.memory_space<vmem>>) attributes {dimension_semantics = [#tpu.dimension_semantics<parallel>], iteration_bounds = array<i64: 2>, scalar_prefetch = 0 : i64, scratch_operands = 0 : i64, tpu.core_type = #tpu.core_type<tc>, window_params = [{transform_indices = @transform_0, window_bounds = array<i64: 8, 32>}, {pipeline_mode = #tpu.pipeline_mode<synchronous>, transform_indices = @transform_1, window_bounds = array<i64: 32, 64>}, {pipeline_mode = #tpu.pipeline_mode<synchronous>, transform_indices = @transform_2, window_bounds = array<i64: 1, 64>}, {pipeline_mode = #tpu.pipeline_mode<synchronous>, transform_indices = @transform_3, window_bounds = array<i64: 64, 32>}, {pipeline_mode = #tpu.pipeline_mode<synchronous>, transform_indices = @transform_4, window_bounds = array<i64: 32, 32>}, {pipeline_mode = #tpu.pipeline_mode<synchronous>, transform_indices = @transform_5, window_bounds = array<i64: 1, 32>}, {transform_indices = @transform_6, window_bounds = array<i64: 8, 32>}]} {
    %c0 = arith.constant 0 : index
    %c0_0 = arith.constant 0 : index
    %0 = vector.load %arg1[%c0, %c0_0] : memref<8x32xf32, #tpu.memory_space<vmem>>, vector<8x32xf32>
    %c0_1 = arith.constant 0 : index
    %c0_2 = arith.constant 0 : index
    %1 = vector.load %arg2[%c0_1, %c0_2] : memref<32x64xf32, #tpu.memory_space<vmem>>, vector<32x64xf32>
    %cst = arith.constant dense<0.000000e+00> : vector<8x64xf32>
    %2 = tpu.matmul %0, %1, %cst {dimension_numbers = #tpu.dot_dimension_numbers<[1], [0], [0], [1], [0, 0, 1, 1], [], []>} : vector<8x32xf32>, vector<32x64xf32>, vector<8x64xf32> -> vector<8x64xf32>
    %c0_3 = arith.constant 0 : index
    %c0_4 = arith.constant 0 : index
    %3 = vector.load %arg3[%c0_3, %c0_4] : memref<1x64xf32, #tpu.memory_space<vmem>>, vector<1x64xf32>
    %4 = vector.broadcast %3 : vector<1x64xf32> to vector<8x64xf32>
    %5 = arith.addf %2, %4 : vector<8x64xf32>
    %6 = arith.negf %5 : vector<8x64xf32>
    %7 = math.exp %6 : vector<8x64xf32>
    %cst_5 = arith.constant 1.000000e+00 : f32
    %8 = vector.broadcast %cst_5 : f32 to vector<8x64xf32>
    %9 = arith.addf %8, %7 : vector<8x64xf32>
    %10 = arith.divf %8, %9 : vector<8x64xf32>
    %11 = arith.mulf %5, %10 : vector<8x64xf32>
    %c0_6 = arith.constant 0 : index
    %c0_7 = arith.constant 0 : index
    %12 = vector.load %arg4[%c0_6, %c0_7] : memref<64x32xf32, #tpu.memory_space<vmem>>, vector<64x32xf32>
    %cst_8 = arith.constant dense<0.000000e+00> : vector<8x32xf32>
    %13 = tpu.matmul %11, %12, %cst_8 {dimension_numbers = #tpu.dot_dimension_numbers<[1], [0], [0], [1], [0, 0, 1, 1], [], []>} : vector<8x64xf32>, vector<64x32xf32>, vector<8x32xf32> -> vector<8x32xf32>
    %c0_9 = arith.constant 0 : index
    %c0_10 = arith.constant 0 : index
    %14 = vector.load %arg5[%c0_9, %c0_10] : memref<32x32xf32, #tpu.memory_space<vmem>>, vector<32x32xf32>
    %cst_11 = arith.constant dense<0.000000e+00> : vector<8x32xf32>
    %15 = tpu.matmul %0, %14, %cst_11 {dimension_numbers = #tpu.dot_dimension_numbers<[1], [0], [0], [1], [0, 0, 1, 1], [], []>} : vector<8x32xf32>, vector<32x32xf32>, vector<8x32xf32> -> vector<8x32xf32>
    %16 = arith.addf %13, %15 : vector<8x32xf32>
    %c0_12 = arith.constant 0 : index
    %c0_13 = arith.constant 0 : index
    %17 = vector.load %arg6[%c0_12, %c0_13] : memref<1x32xf32, #tpu.memory_space<vmem>>, vector<1x32xf32>
    %18 = vector.broadcast %17 : vector<1x32xf32> to vector<8x32xf32>
    %19 = arith.addf %16, %18 : vector<8x32xf32>
    %c0_14 = arith.constant 0 : index
    %c0_15 = arith.constant 0 : index
    %20 = vector.load %arg7[%c0_14, %c0_15] : memref<8x32xf32, #tpu.memory_space<vmem>>, vector<8x32xf32>
    tpu.vector_store %arg7[%c0_14, %c0_15], %19 {strides = array<i32>} : memref<8x32xf32, #tpu.memory_space<vmem>>, vector<8x32xf32>,
    return
  }
  func.func @transform_0(%arg0: i32) -> (i32, i32) {
    %c0_i32 = arith.constant 0 : i32
    %c0_i32_0 = arith.constant 0 : i32
    return %arg0, %c0_i32 : i32, i32
  }
  func.func @transform_1(%arg0: i32) -> (i32, i32) {
    %c0_i32 = arith.constant 0 : i32
    %c0_i32_0 = arith.constant 0 : i32
    %c0_i32_1 = arith.constant 0 : i32
    return %c0_i32, %c0_i32_0 : i32, i32
  }
  func.func @transform_2(%arg0: i32) -> (i32, i32) {
    %c0_i32 = arith.constant 0 : i32
    %c0_i32_0 = arith.constant 0 : i32
    %c0_i32_1 = arith.constant 0 : i32
    return %c0_i32, %c0_i32_0 : i32, i32
  }
  func.func @transform_3(%arg0: i32) -> (i32, i32) {
    %c0_i32 = arith.constant 0 : i32
    %c0_i32_0 = arith.constant 0 : i32
    %c0_i32_1 = arith.constant 0 : i32
    return %c0_i32, %c0_i32_0 : i32, i32
  }
  func.func @transform_4(%arg0: i32) -> (i32, i32) {
    %c0_i32 = arith.constant 0 : i32
    %c0_i32_0 = arith.constant 0 : i32
    %c0_i32_1 = arith.constant 0 : i32
    return %c0_i32, %c0_i32_0 : i32, i32
  }
  func.func @transform_5(%arg0: i32) -> (i32, i32) {
    %c0_i32 = arith.constant 0 : i32
    %c0_i32_0 = arith.constant 0 : i32
    %c0_i32_1 = arith.constant 0 : i32
    return %c0_i32, %c0_i32_0 : i32, i32
  }
  func.func @transform_6(%arg0: i32) -> (i32, i32) {
    %c0_i32 = arith.constant 0 : i32
    %c0_i32_0 = arith.constant 0 : i32
    return %arg0, %c0_i32 : i32, i32
  }
}

</mosaic_0001>

<llo_original>
// kernel: tpu_custom_call.1
$region0: #{tpu_custom_call.1}
  #allocation0 [shape = 'u32[]', space=smem, size = 0x4, offset = 0x4, fixed_abs, tag = 'smem constant byte address 0x4 - core index']
  #allocation1 [shape = 'u32[72,128]{1,0:T(1,128)}', space=vmem, size = 0x9000, scoped, tag = 'internal scratch']
  %s0 = inlined_call_operand.hbm [shape: f32[8,128], index: 0, kind: input, shape index: {}]
  %s1 = inlined_call_operand.hbm [shape: f32[8,128], index: 1, kind: output, shape index: {}]
  %s2 = sld [smem:[#allocation0]]
  $region18: #{tpu_custom_call.1} parent=0
    _
  %s4 = ssub.s32 1, %s2
  %s5 = scalar_select 0, %s4, %s2
  $region1: #{tpu_custom_call.1} parent=0
    #allocation2 [shape = 'u8[4096]{0}', space=vmem, size = 0x1000, scoped, tag = 'input window, operand 0, single buffered']
    #allocation3 [shape = 's32[1]{0}', space=sflag, size = 0x4, scoped, tag = 'scoped memory for tpu_custom_call.1']
    #allocation4 [shape = 's32[1]{0}', space=sflag, size = 0x4, scoped, tag = 'scoped memory for tpu_custom_call.1']
    #allocation5 [shape = 'u8[4096]{0}', space=vmem, size = 0x1000, scoped, tag = 'output window, operand 0, single buffered']
    %6 = vsyncpa [#allocation3], 0
    %7 = vsyncpa [#allocation4], 0
    // Predicated region
    $region2: #{tpu_custom_call.1} parent=1 // pred_check
      _
    $region3: #{tpu_custom_call.1} parent=1 // pred_check_branch
      %9 = sbr.rel (0) target = $region5
    $region4: #{tpu_custom_call.1} parent=1 // pred_region
      %11 = vsyncadd [#allocation3], 0
      %s13 = sshll.u32 %s0, 4
      %s14 = int_to_ptr.hbm [resolvable:$true] %s13
      %s15 = sshll.u32 [#allocation2], 4
      %s16 = int_to_ptr.vmem [resolvable:$true] %s15
      %18 = dma.hbm_to_vmem [thread:$0]  %s14, 128, %s16, [#allocation3]
    $region5: #{tpu_custom_call.1} parent=1 // pred_fallthru
      _
    // Predicated region
    $region6: #{tpu_custom_call.1} parent=1 // pred_check
      _
    $region7: #{tpu_custom_call.1} parent=1 // pred_check_branch
      %20 = sbr.rel (0) target = $region9
    $region8: #{tpu_custom_call.1} parent=1 // pred_region
      %22 = dma.done [#allocation3], 128
    $region9: #{tpu_custom_call.1} parent=1 // pred_fallthru
      _
    %v23 = vld [vmem:[#allocation2] sm:$0xff]
    %24 = vst [vmem:[#allocation5] sm:$0xff] %v23
    // Predicated region
    $region10: #{tpu_custom_call.1} parent=1 // pred_check
      _
    $region11: #{tpu_custom_call.1} parent=1 // pred_check_branch
      %26 = sbr.rel (0) target = $region13
    $region12: #{tpu_custom_call.1} parent=1 // pred_region
      %28 = vsyncadd [#allocation4], 0
      %s30 = sshll.u32 [#allocation5], 4
      %s31 = int_to_ptr.vmem [resolvable:$true] %s30
      %s32 = sshll.u32 %s1, 4
      %s33 = int_to_ptr.hbm [resolvable:$true] %s32
      %35 = dma.vmem_to_hbm [thread:$0]  %s31, 128, %s33, [#allocation4]
    $region13: #{tpu_custom_call.1} parent=1 // pred_fallthru
      _
    // Predicated region
    $region14: #{tpu_custom_call.1} parent=1 // pred_check
      _
    $region15: #{tpu_custom_call.1} parent=1 // pred_check_branch
      %37 = sbr.rel (0) target = $region17
    $region16: #{tpu_custom_call.1} parent=1 // pred_region
      %39 = dma.done [#allocation4], 128
    $region17: #{tpu_custom_call.1} parent=1 // pred_fallthru
      _
    %40 = vsyncpa [#allocation3], 1
    %41 = vsyncpa [#allocation4], 1

// kernel: tpu_custom_call.1
$region0: #{tpu_custom_call.1}
  #allocation0 [shape = 'u32[]', space=smem, size = 0x4, offset = 0x4, fixed_abs, tag = 'smem constant byte address 0x4 - core index']
  #allocation1 [shape = 'u32[72,128]{1,0:T(1,128)}', space=vmem, size = 0x9000, scoped, tag = 'internal scratch']
  %s0 = inlined_call_operand.vmem [shape: f32[16,32], index: 0, kind: input, shape index: {}]
  %s1 = inlined_call_operand.vmem [shape: f32[32,64], index: 1, kind: input, shape index: {}]
  %s2 = inlined_call_operand.vmem [shape: f32[1,64], index: 2, kind: input, shape index: {}]
  %s3 = inlined_call_operand.vmem [shape: f32[64,32], index: 3, kind: input, shape index: {}]
  %s4 = inlined_call_operand.vmem [shape: f32[32,32], index: 4, kind: input, shape index: {}]
  %s5 = inlined_call_operand.vmem [shape: f32[1,32], index: 5, kind: input, shape index: {}]
  %s6 = inlined_call_operand.hbm [shape: f32[16,32], index: 6, kind: output, shape index: {}]
  %s7 = sld [smem:[#allocation0]]
  $region57: #{tpu_custom_call.1} parent=0
    _
  %s9 = ssub.s32 1, %s7
  %s10 = scalar_select 0, %s9, %s7
  $region1: #{tpu_custom_call.1} parent=0
    #allocation2 [shape = 'u8[8192]{0}', space=vmem, size = 0x2000, scoped, tag = 'output window, operand 0']
    #allocation3 [shape = 's32[2]{0}', space=sflag, size = 0x8, scoped, tag = 'scoped memory for tpu_custom_call.1']
    %11 = vsyncpa [#allocation3], 0
    %s12 = scalar_lea.sflag [#allocation3], 1
    %13 = vsyncpa %s12, 0
    loop: start=0, step=1, limit=4
    $region2: #{tpu_custom_call.1} parent=1 // loop_pre_header
      _
    $region3: #{tpu_custom_call.1} parent=1 // loop_header
      %s15 = sphi 0, %s19
      %p16 = scmp.ge.s32.totalorder %s15, 4
      %s25 = sphi 0, %s27
      %s28 = sphi 0, %s25
      %s29 = sphi 0, %s28
      %s45 = sphi 0, %s29
      %s49 = sphi 0, %s49
      %s51 = sphi 0, %s49
      %s52 = sphi 0, %s51
      %s66 = sphi 0, %s52
      %s70 = sphi 0, %s70
      %s72 = sphi 0, %s70
      %s73 = sphi 0, %s72
      %s87 = sphi 0, %s73
      %s91 = sphi 0, %s91
      %s93 = sphi 0, %s91
      %s94 = sphi 0, %s93
      %s108 = sphi 0, %s94
      %s112 = sphi 0, %s112
      %s114 = sphi 0, %s112
      %s115 = sphi 0, %s114
      %s129 = sphi 0, %s115
      %s133 = sphi 0, %s133
      %s135 = sphi 0, %s133
      %s136 = sphi 0, %s135
      %s150 = sphi 0, %s136
      %s156 = sphi 0, %s158
      %s159 = sphi 0, %s156
      %s160 = sphi 0, %s159
      %s176 = sphi 0, %s160
    $region4: #{tpu_custom_call.1} parent=1 // loop_header_branch
      %18 = sbr.rel (%p16) target = $region8
    $region5: #{tpu_custom_call.1} parent=1 // loop_body
      %s20 = ssub.s32 %s15, 1
      %s21 = ssub.s32 %s15, 2
      %s22 = sadd.s32 %s15, 1
      %s23 = ssub.s32 %s15, %s22
      %p24 = scmp.eq.s32.totalorder %s23, 0
      %s26 = sadd.s32 %s25, 1
      %s27 = scalar_select %p24, %s25, %s26
      %p30 = pneg %p24
      %p31 = scmp.eq.s32.totalorder %s15, 1
      %p32 = por %p30, %p31
      %p33 = scmp.ne.s32.totalorder %s25, %s28
      %p34 = scmp.eq.s32.totalorder %s15, 0
      %p35 = por %p33, %p34
      %p36 = scmp.ne.s32.totalorder %s25, %s28
      %p37 = scmp.eq.s32.totalorder %s20, 1
      %p38 = por %p36, %p37
      %p39 = scmp.ne.s32.totalorder %s28, %s29
      %p40 = scmp.eq.s32.totalorder %s20, 0
      %p41 = por %p39, %p40
      %p42 = scmp.ne.s32.totalorder %s28, %s29
      %p43 = scmp.eq.s32.totalorder %s21, 1
      %p44 = por %p42, %p43
      %p46 = scmp.ne.s32.totalorder %s29, %s45
      %p47 = scmp.eq.s32.totalorder %s21, 0
      %p48 = por %p46, %p47
      %s50 = sadd.s32 %s49, 1
      %p53 = scmp.eq.s32.totalorder %s15, 1
      %p54 = scmp.ne.s32.totalorder %s49, %s51
      %p55 = scmp.eq.s32.totalorder %s15, 0
      %p56 = por %p54, %p55
      %p57 = scmp.ne.s32.totalorder %s49, %s51
      %p58 = scmp.eq.s32.totalorder %s20, 1
      %p59 = por %p57, %p58
      %p60 = scmp.ne.s32.totalorder %s51, %s52
      %p61 = scmp.eq.s32.totalorder %s20, 0
      %p62 = por %p60, %p61
      %p63 = scmp.ne.s32.totalorder %s51, %s52
      %p64 = scmp.eq.s32.totalorder %s21, 1
      %p65 = por %p63, %p64
      %p67 = scmp.ne.s32.totalorder %s52, %s66
      %p68 = scmp.eq.s32.totalorder %s21, 0
      %p69 = por %p67, %p68
      %s71 = sadd.s32 %s70, 1
      %p74 = scmp.eq.s32.totalorder %s15, 1
      %p75 = scmp.ne.s32.totalorder %s70, %s72
      %p76 = scmp.eq.s32.totalorder %s15, 0
      %p77 = por %p75, %p76
      %p78 = scmp.ne.s32.totalorder %s70, %s72
      %p79 = scmp.eq.s32.totalorder %s20, 1
      %p80 = por %p78, %p79
      %p81 = scmp.ne.s32.totalorder %s72, %s73
      %p82 = scmp.eq.s32.totalorder %s20, 0
      %p83 = por %p81, %p82
      %p84 = scmp.ne.s32.totalorder %s72, %s73
      %p85 = scmp.eq.s32.totalorder %s21, 1
      %p86 = por %p84, %p85
      %p88 = scmp.ne.s32.totalorder %s73, %s87
      %p89 = scmp.eq.s32.totalorder %s21, 0
      %p90 = por %p88, %p89
      %s92 = sadd.s32 %s91, 1
      %p95 = scmp.eq.s32.totalorder %s15, 1
      %p96 = scmp.ne.s32.totalorder %s91, %s93
      %p97 = scmp.eq.s32.totalorder %s15, 0
      %p98 = por %p96, %p97
      %p99 = scmp.ne.s32.totalorder %s91, %s93
      %p100 = scmp.eq.s32.totalorder %s20, 1
      %p101 = por %p99, %p100
      %p102 = scmp.ne.s32.totalorder %s93, %s94
      %p103 = scmp.eq.s32.totalorder %s20, 0
      %p104 = por %p102, %p103
      %p105 = scmp.ne.s32.totalorder %s93, %s94
      %p106 = scmp.eq.s32.totalorder %s21, 1
      %p107 = por %p105, %p106
      %p109 = scmp.ne.s32.totalorder %s94, %s108
      %p110 = scmp.eq.s32.totalorder %s21, 0
      %p111 = por %p109, %p110
      %s113 = sadd.s32 %s112, 1
      %p116 = scmp.eq.s32.totalorder %s15, 1
      %p117 = scmp.ne.s32.totalorder %s112, %s114
      %p118 = scmp.eq.s32.totalorder %s15, 0
      %p119 = por %p117, %p118
      %p120 = scmp.ne.s32.totalorder %s112, %s114
      %p121 = scmp.eq.s32.totalorder %s20, 1
      %p122 = por %p120, %p121
      %p123 = scmp.ne.s32.totalorder %s114, %s115
      %p124 = scmp.eq.s32.totalorder %s20, 0
      %p125 = por %p123, %p124
      %p126 = scmp.ne.s32.totalorder %s114, %s115
      %p127 = scmp.eq.s32.totalorder %s21, 1
      %p128 = por %p126, %p127
      %p130 = scmp.ne.s32.totalorder %s115, %s129
      %p131 = scmp.eq.s32.totalorder %s21, 0
      %p132 = por %p130, %p131
      %s134 = sadd.s32 %s133, 1
      %p137 = scmp.eq.s32.totalorder %s15, 1
      %p138 = scmp.ne.s32.totalorder %s133, %s135
      %p139 = scmp.eq.s32.totalorder %s15, 0
      %p140 = por %p138, %p139
      %p141 = scmp.ne.s32.totalorder %s133, %s135
      %p142 = scmp.eq.s32.totalorder %s20, 1
      %p143 = por %p141, %p142
      %p144 = scmp.ne.s32.totalorder %s135, %s136
      %p145 = scmp.eq.s32.totalorder %s20, 0
      %p146 = por %p144, %p145
      %p147 = scmp.ne.s32.totalorder %s135, %s136
      %p148 = scmp.eq.s32.totalorder %s21, 1
      %p149 = por %p147, %p148
      %p151 = scmp.ne.s32.totalorder %s136, %s150
      %p152 = scmp.eq.s32.totalorder %s21, 0
      %p153 = por %p151, %p152
      %s154 = ssub.s32 %s15, %s22
      %p155 = scmp.eq.s32.totalorder %s154, 0
      %s157 = sadd.s32 %s156, 1
      %s158 = scalar_select %p155, %s156, %s157
      %p161 = pneg %p155
      %p162 = scmp.eq.s32.totalorder %s15, 1
      %p163 = por %p161, %p162
      %p164 = scmp.ne.s32.totalorder %s156, %s159
      %p165 = scmp.eq.s32.totalorder %s15, 0
      %p166 = por %p164, %p165
      %p167 = scmp.ne.s32.totalorder %s156, %s159
      %p168 = scmp.eq.s32.totalorder %s20, 1
      %p169 = por %p167, %p168
      %p170 = scmp.ne.s32.totalorder %s159, %s160
      %p171 = scmp.eq.s32.totalorder %s20, 0
      %p172 = por %p170, %p171
      %p173 = scmp.ne.s32.totalorder %s159, %s160
      %p174 = scmp.eq.s32.totalorder %s21, 1
      %p175 = por %p173, %p174
      %p177 = scmp.ne.s32.totalorder %s160, %s176
      %p178 = scmp.eq.s32.totalorder %s21, 0
      %p179 = por %p177, %p178
      %p180 = scmp.le.s32.totalorder 1, %s15
      %p181 = scmp.lt.s32.totalorder %s15, 3
      %p182 = pnand %p180, %p181
      %p183 = pneg %p182
      // Predicated region
      $region9: #{tpu_custom_call.1} parent=5 // pred_check
        _
      $region10: #{tpu_custom_call.1} parent=5 // pred_check_branch
        %185 = sbr.rel (%p182) target = $region12
      $region11: #{tpu_custom_call.1} parent=5 // pred_region
        %s186 = ssub.s32 %s15, 1
        // Predicated region
        $region13: #{tpu_custom_call.1} parent=11 // pred_check
          %p187 = pneg %p62
        $region14: #{tpu_custom_call.1} parent=11 // pred_check_branch
          %189 = sbr.rel (%p187) target = $region16
        $region15: #{tpu_custom_call.1} parent=11 // pred_region
          _
        $region16: #{tpu_custom_call.1} parent=11 // pred_fallthru
          _
        // Predicated region
        $region17: #{tpu_custom_call.1} parent=11 // pred_check
          %p190 = pneg %p83
        $region18: #{tpu_custom_call.1} parent=11 // pred_check_branch
          %192 = sbr.rel (%p190) target = $region20
        $region19: #{tpu_custom_call.1} parent=11 // pred_region
          _
        $region20: #{tpu_custom_call.1} parent=11 // pred_fallthru
          _
        // Predicated region
        $region21: #{tpu_custom_call.1} parent=11 // pred_check
          %p193 = pneg %p104
        $region22: #{tpu_custom_call.1} parent=11 // pred_check_branch
          %195 = sbr.rel (%p193) target = $region24
        $region23: #{tpu_custom_call.1} parent=11 // pred_region
          _
        $region24: #{tpu_custom_call.1} parent=11 // pred_fallthru
          _
        // Predicated region
        $region25: #{tpu_custom_call.1} parent=11 // pred_check
          %p196 = pneg %p125
        $region26: #{tpu_custom_call.1} parent=11 // pred_check_branch
          %198 = sbr.rel (%p196) target = $region28
        $region27: #{tpu_custom_call.1} parent=11 // pred_region
          _
        $region28: #{tpu_custom_call.1} parent=11 // pred_fallthru
          _
        // Predicated region
        $region29: #{tpu_custom_call.1} parent=11 // pred_check
          %p199 = pneg %p146
        $region30: #{tpu_custom_call.1} parent=11 // pred_check_branch
          %201 = sbr.rel (%p199) target = $region32
        $region31: #{tpu_custom_call.1} parent=11 // pred_region
          _
        $region32: #{tpu_custom_call.1} parent=11 // pred_fallthru
          _
      $region12: #{tpu_custom_call.1} parent=5 // pred_fallthru
        _
      %p202 = scmp.lt.s32.totalorder %s15, 2
      // Predicated region
      $region33: #{tpu_custom_call.1} parent=5 // pred_check
        %p203 = pneg %p202
      $region34: #{tpu_custom_call.1} parent=5 // pred_check_branch
        %205 = sbr.rel (%p203) target = $region36
      $region35: #{tpu_custom_call.1} parent=5 // pred_region
        // Predicated region
        $region37: #{tpu_custom_call.1} parent=35 // pred_check
          %p206 = pneg %p35
        $region38: #{tpu_custom_call.1} parent=35 // pred_check_branch
          %208 = sbr.rel (%p206) target = $region40
        $region39: #{tpu_custom_call.1} parent=35 // pred_region
          %p209 = scmp.lt.s32.totalorder %s15, 1
          %s210 = scalar_select %p209, %s15, 1
          %s211 = smul.addr %s210, 8
          %s212 = scalar_lea.vmem %s0, %s211
        $region40: #{tpu_custom_call.1} parent=35 // pred_fallthru
          _
      $region36: #{tpu_custom_call.1} parent=5 // pred_fallthru
        _
      %p213 = scmp.le.s32.totalorder 1, %s15
      %p214 = scmp.lt.s32.totalorder %s15, 3
      %p215 = pnand %p213, %p214
      %p216 = pneg %p215
      // Predicated region
      $region41: #{tpu_custom_call.1} parent=5 // pred_check
        _
      $region42: #{tpu_custom_call.1} parent=5 // pred_check_branch
        %218 = sbr.rel (%p215) target = $region44
      $region43: #{tpu_custom_call.1} parent=5 // pred_region
        %s219 = ssub.s32 %s15, 1
        %p220 = scmp.lt.s32.totalorder %s20, 1
        %s221 = scalar_select %p220, %s20, 1
        %s222 = smul.addr %s221, 8
        %s223 = scalar_lea.vmem %s0, %s222
        %p224 = pneg %p41
        %p225 = pneg %p38
        %p226 = pneg %p62
        %p227 = pneg %p59
        %p228 = pneg %p83
        %p229 = pneg %p80
        %p230 = pneg %p104
        %p231 = pneg %p101
        %p232 = pneg %p125
        %p233 = pneg %p122
        %p234 = pneg %p146
        %p235 = pneg %p143
        %p236 = pneg %p172
        %p237 = pneg %p169
        %s238 = sand.u32 %s159, 1
        %s239 = scalar_lea.sflag [#allocation3], %s238
        %s240 = sand.u32 %s159, 1
        %s241 = smul.addr %s240, 8
        %s242 = scalar_lea.vmem [#allocation2], %s241
        %p243 = scmp.lt.s32.totalorder %s20, 1
        %s244 = scalar_select %p243, %s20, 1
        %s245 = smul.addr %s244, 8
        %s246 = scalar_lea.vmem %s0, %s245
        %v247 = vld [vmem:[%s246] sm:$0xff]
        %v248 = vld [vmem:[%s1] sm:$0xff]
        %v249 = vld [vmem:[%s1 + $0x8] sm:$0xff]
        %v250 = vld [vmem:[%s1 + $0x10] sm:$0xff]
        %v251 = vld [vmem:[%s1 + $0x18] sm:$0xff]
        %v252 = vld [vmem:[%s2] sm:$0x1]
        %v254 = vperm.slane %v252, 0
        %vm256 = vcmask 261120
        %v258 = vsel %vm256, %v247, 0
        %260 = vmatpush.msra.mxu0 0.0
        %261 = vmatpush.msra.mxu0 0.0
        %262 = vmatpush.msra.mxu0 0.0
        %263 = vmatpush.msra.mxu0 0.0
        %264 = vmatpush.msra.mxu0 0.0
        %265 = vmatpush.msra.mxu0 0.0
        %266 = vmatpush.msra.mxu0 0.0
        %267 = vmatpush.msra.mxu0 0.0
        %268 = vmatpush.msra.mxu0 0.0
        %269 = vmatpush.msra.mxu0 0.0
        %270 = vmatpush.msra.mxu0 0.0
        %271 = vmatpush.msra.mxu0 0.0
        %272 = vmatpush.msra.mxu0 %v251
        %273 = vmatpush.msra.mxu0 %v250
        %274 = vmatpush.msra.mxu0 %v249
        %275 = vmatpush.msra.mxu0 %v248
        %276 = vmatmul.f32.gmra.mxu0 %v258
        %v277 = vpop.f32.mrf.mxu0
        %v278 = vadd.f32 %v254, %v277
        %279 = vdwg.mxu0
        %v280 = vxor.u32 %v278, 2147483648
        %v281 = vmul.f32 %v280, 1.442695
        %v282 = vpow.pop %v281
        %v283 = vadd.f32 %v282, 1.0
        %v284 = vrcp.pop %v283
        %v285 = vmul.f32 %v283, %v284
        %v286 = vsub.f32 1.0, %v285
        %v287 = vmul.f32 %v284, %v286
        %v288 = vadd.f32 %v284, %v287
        %vm289 = vweird.f32 %v283
        %vm290 = vweird.f32 %v284
        %vm291 = vmor %vm289, %vm290
        %v292 = vsel %vm291, %v284, %v288
        %v293 = vand.u32 2147483647, %v283
        %vm294 = vcmp.eq.f32.partialorder %v293, 8.507059e+37
        %v295 = vand.u32 %v283, 2147483648
        %v296 = vor.u32 1.1754944e-38, %v295
        %v297 = vsel %vm294, %v296, %v292
        %v298 = vmul.f32 1.0, %v297
        %v299 = vmul.f32 %v278, %v298
        %v300 = vld [vmem:[%s3] sm:$0xff]
        %v301 = vld [vmem:[%s3 + $0x8] sm:$0xff]
        %v302 = vld [vmem:[%s3 + $0x10] sm:$0xff]
        %v303 = vld [vmem:[%s3 + $0x18] sm:$0xff]
        %v304 = vld [vmem:[%s3 + $0x20] sm:$0xff]
        %v305 = vld [vmem:[%s3 + $0x28] sm:$0xff]
        %v306 = vld [vmem:[%s3 + $0x30] sm:$0xff]
        %v307 = vld [vmem:[%s3 + $0x38] sm:$0xff]
        %v308 = vld [vmem:[%s4] sm:$0xff]
        %v309 = vld [vmem:[%s4 + $0x8] sm:$0xff]
        %v310 = vld [vmem:[%s4 + $0x10] sm:$0xff]
        %v311 = vld [vmem:[%s4 + $0x18] sm:$0xff]
        %312 = vmatpush.msra.mxu0 0.0
        %313 = vmatpush.msra.mxu0 0.0
        %314 = vmatpush.msra.mxu0 0.0
        %315 = vmatpush.msra.mxu0 0.0
        %316 = vmatpush.msra.mxu0 0.0
        %317 = vmatpush.msra.mxu0 0.0
        %318 = vmatpush.msra.mxu0 0.0
        %319 = vmatpush.msra.mxu0 0.0
        %320 = vmatpush.msra.mxu0 0.0
        %321 = vmatpush.msra.mxu0 0.0
        %322 = vmatpush.msra.mxu0 0.0
        %323 = vmatpush.msra.mxu0 0.0
        %324 = vmatpush.msra.mxu0 %v311
        %325 = vmatpush.msra.mxu0 %v310
        %326 = vmatpush.msra.mxu0 %v309
        %327 = vmatpush.msra.mxu0 %v308
        %328 = vmatmul.f32.gmra.mxu0 %v258
        %v329 = vpop.f32.mrf.mxu0
        %v330 = vadd.f32 0.0, %v329
        %331 = vdwg.mxu0
        %vm332 = vcmask 523264
        %v334 = vsel %vm332, %v299, 0
        %336 = vmatpush.msra.mxu0 0.0
        %337 = vmatpush.msra.mxu0 0.0
        %338 = vmatpush.msra.mxu0 0.0
        %339 = vmatpush.msra.mxu0 0.0
        %340 = vmatpush.msra.mxu0 0.0
        %341 = vmatpush.msra.mxu0 0.0
        %342 = vmatpush.msra.mxu0 0.0
        %343 = vmatpush.msra.mxu0 0.0
        %344 = vmatpush.msra.mxu0 %v307
        %345 = vmatpush.msra.mxu0 %v306
        %346 = vmatpush.msra.mxu0 %v305
        %347 = vmatpush.msra.mxu0 %v304
        %348 = vmatpush.msra.mxu0 %v303
        %349 = vmatpush.msra.mxu0 %v302
        %350 = vmatpush.msra.mxu0 %v301
        %351 = vmatpush.msra.mxu0 %v300
        %352 = vmatmul.f32.gmra.mxu0 %v334
        %v353 = vpop.f32.mrf.mxu0
        %v354 = vadd.f32 %v330, %v353
        %355 = vdwg.mxu0
        %v356 = vld [vmem:[%s5] sm:$0x1]
        %v358 = vperm.slane %v356, 0
        %v360 = vadd.f32 %v354, %v358
        %361 = vst.msk [vmem:[%s242] sm:$0xff] %vm256, %v360
        %s362 = sand.u32 %s159, 1
        %s363 = scalar_lea.sflag [#allocation3], %s362
        %s364 = sand.u32 %s159, 1
        %s365 = smul.addr %s364, 8
        %s366 = scalar_lea.vmem [#allocation2], %s365
        // Predicated region
        $region45: #{tpu_custom_call.1} parent=43 // pred_check
          %p367 = pneg %p169
        $region46: #{tpu_custom_call.1} parent=43 // pred_check_branch
          %369 = sbr.rel (%p367) target = $region48
        $region47: #{tpu_custom_call.1} parent=43 // pred_region
          %371 = vsyncadd %s363, 0
          %s372 = smul.addr %s20, 8
          %s373 = scalar_lea.hbm %s6, %s372
          %s375 = sshll.u32 %s366, 4
          %s376 = int_to_ptr.vmem [resolvable:$true] %s375
          %s377 = sshll.u32 %s373, 4
          %s378 = int_to_ptr.hbm [resolvable:$true] %s377
          %380 = dma.vmem_to_hbm [thread:$0]  %s376, 128, %s378, %s363
        $region48: #{tpu_custom_call.1} parent=43 // pred_fallthru
          _
      $region44: #{tpu_custom_call.1} parent=5 // pred_fallthru
        _
      %p381 = scmp.le.s32.totalorder 2, %s15
      // Predicated region
      $region49: #{tpu_custom_call.1} parent=5 // pred_check
        %p382 = pneg %p381
      $region50: #{tpu_custom_call.1} parent=5 // pred_check_branch
        %384 = sbr.rel (%p382) target = $region52
      $region51: #{tpu_custom_call.1} parent=5 // pred_region
        %s385 = ssub.s32 %s15, 2
        // Predicated region
        $region53: #{tpu_custom_call.1} parent=51 // pred_check
          %p386 = pneg %p175
        $region54: #{tpu_custom_call.1} parent=51 // pred_check_branch
          %388 = sbr.rel (%p386) target = $region56
        $region55: #{tpu_custom_call.1} parent=51 // pred_region
          %s389 = sand.u32 %s160, 1
          %s390 = scalar_lea.sflag [#allocation3], %s389
          %s391 = sand.u32 %s160, 1
          %s392 = smul.addr %s391, 8
          %s393 = scalar_lea.vmem [#allocation2], %s392
          %395 = dma.done %s390, 128
        $region56: #{tpu_custom_call.1} parent=51 // pred_fallthru
          _
      $region52: #{tpu_custom_call.1} parent=5 // pred_fallthru
        _
    $region6: #{tpu_custom_call.1} parent=1 // loop_footer
      %s19 = sadd.s32 1, %s15
    $region7: #{tpu_custom_call.1} parent=1 // loop_footer_branch
      %14 = sbr.rel target = $region3
    $region8: #{tpu_custom_call.1} parent=1 // loop_exit
      _
    %396 = vsyncpa [#allocation3], 1
    %s397 = scalar_lea.sflag [#allocation3], 1
    %398 = vsyncpa %s397, 1

</llo_original>
